<compile_context>
chip_gen: v6e
topology: v6e:2x2x1
jax: 0.10.0
libtpu: 0.0.40
codegen_flags: <defaults>
</compile_context>

<pallas_src>
import jax
import jax.numpy as jnp
from jax.experimental import pallas as pl
from jax.experimental.pallas import tpu as pltpu

LANES = 128  # TPU lane width; all feature dims are padded to this.


def _round_up(x, m):
    return ((x + m - 1) // m) * m


def _policy_mlp_kernel(x_ref, w1_ref, w2_ref, w3_ref, b_ref, out_ref):
    # x: (TB, S) f32 -> bf16 for the MXU; all accumulation stays f32.
    x = x_ref[...].astype(jnp.bfloat16)

    # Layer 1: Linear + ReLU      (TB, S) @ (S, 128)
    h1 = jnp.dot(x, w1_ref[...], preferred_element_type=jnp.float32)
    h1 = jnp.maximum(h1 + b_ref[0:1, :], 0.0)

    # Layer 2: Linear + ReLU      (TB, 128) @ (128, 128)
    h2 = jnp.dot(h1.astype(jnp.bfloat16), w2_ref[...],
                 preferred_element_type=jnp.float32)
    h2 = jnp.maximum(h2 + b_ref[1:2, :], 0.0)

    # Layer 3: Linear + Tanh      (TB, 128) @ (128, 128); pad lanes hold tanh(0)=0
    a = jnp.dot(h2.astype(jnp.bfloat16), w3_ref[...],
                preferred_element_type=jnp.float32)
    out_ref[...] = jnp.tanh(a + b_ref[2:3, :])   # full-tile, lane-dense store


def pack_params(params, lanes=LANES):
    """Pack natural-shape f32 params into the kernel layout:
    bf16 weights zero-padded to `lanes` output features, one f32 bias slab."""
    S, H = params["w1"].shape
    _, A = params["w3"].shape
    assert H <= lanes and A <= lanes

    w1 = jnp.zeros((S, lanes), jnp.bfloat16)
    w1 = w1.at[:, :H].set(params["w1"].astype(jnp.bfloat16))
    w2 = jnp.zeros((lanes, lanes), jnp.bfloat16)
    w2 = w2.at[:H, :H].set(params["w2"].astype(jnp.bfloat16))
    w3 = jnp.zeros((lanes, lanes), jnp.bfloat16)
    w3 = w3.at[:H, :A].set(params["w3"].astype(jnp.bfloat16))

    bias = jnp.zeros((3, lanes), jnp.float32)
    bias = bias.at[0, :H].set(params["b1"].reshape(-1))
    bias = bias.at[1, :H].set(params["b2"].reshape(-1))
    bias = bias.at[2, :A].set(params["b3"].reshape(-1))

    return {"w1": w1, "w2": w2, "w3": w3, "bias": bias,
            "state_dim": int(S), "action_dim": int(A)}


def policy_network_forward(state, packed, *, batch_tile=256):
    """state: (B, state_dim) f32 -> (B, action_dim) f32 in (-1, 1)."""
    B, S = state.shape
    A = packed["action_dim"]
    lanes = packed["w3"].shape[1]

    # Batch tile: multiple of 8 sublanes, capped at batch_tile rows per step.
    TB = min(batch_tile, _round_up(B, 8))
    num_tiles = pl.cdiv(B, TB)
    B_pad = num_tiles * TB
    x = state if B_pad == B else jnp.pad(state, ((0, B_pad - B), (0, 0)))

    out = pl.pallas_call(
        _policy_mlp_kernel,
        out_shape=jax.ShapeDtypeStruct((B_pad, lanes), jnp.float32),
        grid=(num_tiles,),
        in_specs=[
            pl.BlockSpec((TB, S), lambda i: (i, 0)),          # batch-tiled input
            pl.BlockSpec((S, lanes), lambda i: (0, 0)),       # w1 resident
            pl.BlockSpec((lanes, lanes), lambda i: (0, 0)),   # w2 resident
            pl.BlockSpec((lanes, lanes), lambda i: (0, 0)),   # w3 resident
            pl.BlockSpec((3, lanes), lambda i: (0, 0)),       # bias slab resident
        ],
        out_specs=pl.BlockSpec((TB, lanes), lambda i: (i, 0)),
        compiler_params=pltpu.CompilerParams(
            dimension_semantics=("parallel",),                # shard batch on v7x's 2 TCs
        ),
    )(x, packed["w1"], packed["w2"], packed["w3"], packed["bias"])

    return out[:B, :A]


def init_params(key, state_dim, action_dim, hidden_dim):
    """PyTorch-Linear-style init, weights stored as (in_features, out_features)."""
    ks = jax.random.split(key, 6)

    def lin(kw, kb, fan_in, fan_out):
        bound = 1.0 / jnp.sqrt(fan_in)
        w = jax.random.uniform(kw, (fan_in, fan_out), jnp.float32, -bound, bound)
        b = jax.random.uniform(kb, (1, fan_out), jnp.float32, -bound, bound)
        return w, b

    w1, b1 = lin(ks[0], ks[1], state_dim, hidden_dim)
    w2, b2 = lin(ks[2], ks[3], hidden_dim, hidden_dim)
    w3, b3 = lin(ks[4], ks[5], hidden_dim, action_dim)
    return {"w1": w1, "b1": b1, "w2": w2, "b2": b2, "w3": w3, "b3": b3}


def _reference(x, p):
    h1 = jnp.maximum(x @ p["w1"] + p["b1"], 0.0)
    h2 = jnp.maximum(h1 @ p["w2"] + p["b2"], 0.0)
    return jnp.tanh(h2 @ p["w3"] + p["b3"])


if __name__ == "__main__":
    # HalfCheetah-like small dims: state_dim=17, action_dim=6, hidden_dim=32.
    state_dim, action_dim, hidden_dim = 17, 6, 32

    key = jax.random.PRNGKey(0)
    k_params, k_small, k_big = jax.random.split(key, 3)
    params = init_params(k_params, state_dim, action_dim, hidden_dim)
    packed = pack_params(params)

    # Small batch (single grid step, padded 4 -> 8 rows).
    state_small = jax.random.normal(k_small, (4, state_dim), jnp.float32)
    out_small = jax.block_until_ready(policy_network_forward(state_small, packed))
    assert out_small.shape == (4, action_dim)
    assert jnp.allclose(out_small, _reference(state_small, params),
                        atol=2e-2, rtol=2e-2)  # bf16 weights, f32 accumulation

    # Larger, non-multiple batch: exercises padding + multi-step grid (2 tiles).
    state_big = jax.random.normal(k_big, (300, state_dim), jnp.float32)
    out_big = jax.block_until_ready(policy_network_forward(state_big, packed))
    assert out_big.shape == (300, action_dim)
    assert jnp.allclose(out_big, _reference(state_big, params),
                        atol=2e-2, rtol=2e-2)

    print("KERNEL_OK")
</pallas_src>

<mosaic_0001>
module attributes {stable_mosaic.version = 11 : i64} {
  func.func @_policy_mlp_kernel(%arg0: i32, %arg1: memref<8x17xf32, #tpu.memory_space<vmem>>, %arg2: memref<17x128xbf16, #tpu.memory_space<vmem>>, %arg3: memref<128x128xbf16, #tpu.memory_space<vmem>>, %arg4: memref<128x128xbf16, #tpu.memory_space<vmem>>, %arg5: memref<3x128xf32, #tpu.memory_space<vmem>>, %arg6: memref<8x128xf32, #tpu.memory_space<vmem>>) attributes {dimension_semantics = [#tpu.dimension_semantics<parallel>], iteration_bounds = array<i64: 1>, scalar_prefetch = 0 : i64, scratch_operands = 0 : i64, tpu.core_type = #tpu.core_type<tc>, window_params = [{transform_indices = @transform_0, window_bounds = array<i64: 8, 17>}, {pipeline_mode = #tpu.pipeline_mode<synchronous>, transform_indices = @transform_1, window_bounds = array<i64: 17, 128>}, {pipeline_mode = #tpu.pipeline_mode<synchronous>, transform_indices = @transform_2, window_bounds = array<i64: 128, 128>}, {pipeline_mode = #tpu.pipeline_mode<synchronous>, transform_indices = @transform_3, window_bounds = array<i64: 128, 128>}, {pipeline_mode = #tpu.pipeline_mode<synchronous>, transform_indices = @transform_4, window_bounds = array<i64: 3, 128>}, {transform_indices = @transform_5, window_bounds = array<i64: 8, 128>}]} {
    %c0 = arith.constant 0 : index
    %c0_0 = arith.constant 0 : index
    %0 = vector.load %arg1[%c0, %c0_0] : memref<8x17xf32, #tpu.memory_space<vmem>>, vector<8x17xf32>
    %1 = arith.truncf %0 : vector<8x17xf32> to vector<8x17xbf16>
    %c0_1 = arith.constant 0 : index
    %c0_2 = arith.constant 0 : index
    %2 = vector.load %arg2[%c0_1, %c0_2] : memref<17x128xbf16, #tpu.memory_space<vmem>>, vector<17x128xbf16>
    %cst = arith.constant dense<0.000000e+00> : vector<8x128xf32>
    %3 = tpu.matmul %1, %2, %cst {dimension_numbers = #tpu.dot_dimension_numbers<[1], [0], [0], [1], [0, 0, 1, 1], [], []>} : vector<8x17xbf16>, vector<17x128xbf16>, vector<8x128xf32> -> vector<8x128xf32>
    %c0_3 = arith.constant 0 : index
    %c0_4 = arith.constant 0 : index
    %4 = vector.load %arg5[%c0_3, %c0_4] : memref<3x128xf32, #tpu.memory_space<vmem>>, vector<1x128xf32>
    %5 = vector.broadcast %4 : vector<1x128xf32> to vector<8x128xf32>
    %6 = arith.addf %3, %5 : vector<8x128xf32>
    %cst_5 = arith.constant 0.000000e+00 : f32
    %7 = vector.broadcast %cst_5 : f32 to vector<8x128xf32>
    %8 = arith.maximumf %6, %7 : vector<8x128xf32>
    %9 = arith.truncf %8 : vector<8x128xf32> to vector<8x128xbf16>
    %c0_6 = arith.constant 0 : index
    %c0_7 = arith.constant 0 : index
    %10 = vector.load %arg3[%c0_6, %c0_7] : memref<128x128xbf16, #tpu.memory_space<vmem>>, vector<128x128xbf16>
    %cst_8 = arith.constant dense<0.000000e+00> : vector<8x128xf32>
    %11 = tpu.matmul %9, %10, %cst_8 {dimension_numbers = #tpu.dot_dimension_numbers<[1], [0], [0], [1], [0, 0, 1, 1], [], []>} : vector<8x128xbf16>, vector<128x128xbf16>, vector<8x128xf32> -> vector<8x128xf32>
    %c1 = arith.constant 1 : index
    %c0_9 = arith.constant 0 : index
    %12 = vector.load %arg5[%c1, %c0_9] : memref<3x128xf32, #tpu.memory_space<vmem>>, vector<1x128xf32>
    %13 = vector.broadcast %12 : vector<1x128xf32> to vector<8x128xf32>
    %14 = arith.addf %11, %13 : vector<8x128xf32>
    %cst_10 = arith.constant 0.000000e+00 : f32
    %15 = vector.broadcast %cst_10 : f32 to vector<8x128xf32>
    %16 = arith.maximumf %14, %15 : vector<8x128xf32>
    %17 = arith.truncf %16 : vector<8x128xf32> to vector<8x128xbf16>
    %c0_11 = arith.constant 0 : index
    %c0_12 = arith.constant 0 : index
    %18 = vector.load %arg4[%c0_11, %c0_12] : memref<128x128xbf16, #tpu.memory_space<vmem>>, vector<128x128xbf16>
    %cst_13 = arith.constant dense<0.000000e+00> : vector<8x128xf32>
    %19 = tpu.matmul %17, %18, %cst_13 {dimension_numbers = #tpu.dot_dimension_numbers<[1], [0], [0], [1], [0, 0, 1, 1], [], []>} : vector<8x128xbf16>, vector<128x128xbf16>, vector<8x128xf32> -> vector<8x128xf32>
    %c2 = arith.constant 2 : index
    %c0_14 = arith.constant 0 : index
    %20 = vector.load %arg5[%c2, %c0_14] : memref<3x128xf32, #tpu.memory_space<vmem>>, vector<1x128xf32>
    %21 = vector.broadcast %20 : vector<1x128xf32> to vector<8x128xf32>
    %22 = arith.addf %19, %21 : vector<8x128xf32>
    %23 = math.tanh %22 : vector<8x128xf32>
    %c0_15 = arith.constant 0 : index
    %c0_16 = arith.constant 0 : index
    %24 = vector.load %arg6[%c0_15, %c0_16] : memref<8x128xf32, #tpu.memory_space<vmem>>, vector<8x128xf32>
    tpu.vector_store %arg6[%c0_15, %c0_16], %23 {strides = array<i32>} : memref<8x128xf32, #tpu.memory_space<vmem>>, vector<8x128xf32>,
    return
  }
  func.func @transform_0(%arg0: i32) -> (i32, i32) {
    %c0_i32 = arith.constant 0 : i32
    %c0_i32_0 = arith.constant 0 : i32
    return %arg0, %c0_i32 : i32, i32
  }
  func.func @transform_1(%arg0: i32) -> (i32, i32) {
    %c0_i32 = arith.constant 0 : i32
    %c0_i32_0 = arith.constant 0 : i32
    %c0_i32_1 = arith.constant 0 : i32
    return %c0_i32, %c0_i32_0 : i32, i32
  }
  func.func @transform_2(%arg0: i32) -> (i32, i32) {
    %c0_i32 = arith.constant 0 : i32
    %c0_i32_0 = arith.constant 0 : i32
    %c0_i32_1 = arith.constant 0 : i32
    return %c0_i32, %c0_i32_0 : i32, i32
  }
  func.func @transform_3(%arg0: i32) -> (i32, i32) {
    %c0_i32 = arith.constant 0 : i32
    %c0_i32_0 = arith.constant 0 : i32
    %c0_i32_1 = arith.constant 0 : i32
    return %c0_i32, %c0_i32_0 : i32, i32
  }
  func.func @transform_4(%arg0: i32) -> (i32, i32) {
    %c0_i32 = arith.constant 0 : i32
    %c0_i32_0 = arith.constant 0 : i32
    %c0_i32_1 = arith.constant 0 : i32
    return %c0_i32, %c0_i32_0 : i32, i32
  }
  func.func @transform_5(%arg0: i32) -> (i32, i32) {
    %c0_i32 = arith.constant 0 : i32
    %c0_i32_0 = arith.constant 0 : i32
    return %arg0, %c0_i32 : i32, i32
  }
}

</mosaic_0001>

<llo_original>
// kernel: tpu_custom_call.1
$region0: #{tpu_custom_call.1}
  #allocation0 [shape = 'u32[]', space=smem, size = 0x4, offset = 0x4, fixed_abs, tag = 'smem constant byte address 0x4 - core index']
  #allocation1 [shape = 'u32[144,128]{1,0:T(1,128)}', space=vmem, size = 0x12000, scoped, tag = 'internal scratch']
  %s0 = inlined_call_operand.hbm [shape: f32[8,17], index: 0, kind: input, shape index: {}]
  %s1 = inlined_call_operand.hbm [shape: bf16[17,128], index: 1, kind: input, shape index: {}]
  %s2 = inlined_call_operand.hbm [shape: bf16[128,128], index: 2, kind: input, shape index: {}]
  %s3 = inlined_call_operand.hbm [shape: bf16[128,128], index: 3, kind: input, shape index: {}]
  %s4 = inlined_call_operand.vmem [shape: f32[3,128], index: 4, kind: input, shape index: {}]
  %s5 = inlined_call_operand.hbm [shape: f32[8,128], index: 5, kind: output, shape index: {}]
  %s6 = sld [smem:[#allocation0]]
  $region46: #{tpu_custom_call.1} parent=0
    _
  %s8 = ssub.s32 1, %s6
  %s9 = scalar_select 0, %s8, %s6
  $region1: #{tpu_custom_call.1} parent=0
    #allocation2 [shape = 'u8[4096]{0}', space=vmem, size = 0x1000, scoped, tag = 'input window, operand 0, single buffered']
    #allocation3 [shape = 's32[1]{0}', space=sflag, size = 0x4, scoped, tag = 'scoped memory for tpu_custom_call.1']
    #allocation4 [shape = 's32[1]{0}', space=sflag, size = 0x4, scoped, tag = 'scoped memory for tpu_custom_call.1']
    #allocation5 [shape = 'u8[6144]{0}', space=vmem, size = 0x1800, scoped, tag = 'input window, operand 1, single buffered']
    #allocation6 [shape = 's32[1]{0}', space=sflag, size = 0x4, scoped, tag = 'scoped memory for tpu_custom_call.1']
    #allocation7 [shape = 'u8[32768]{0}', space=vmem, size = 0x8000, scoped, tag = 'input window, operand 2, single buffered']
    #allocation8 [shape = 'u8[32768]{0}', space=vmem, size = 0x8000, scoped, tag = 'input window, operand 3, single buffered']
    #allocation9 [shape = 's32[1]{0}', space=sflag, size = 0x4, scoped, tag = 'scoped memory for tpu_custom_call.1']
    #allocation10 [shape = 'u8[4096]{0}', space=vmem, size = 0x1000, scoped, tag = 'output window, operand 0, single buffered']
    %10 = vsyncpa [#allocation3], 0
    %11 = vsyncpa [#allocation6], 0
    %12 = vsyncpa [#allocation9], 0
    %13 = vsyncpa [#allocation4], 0
    // Predicated region
    $region2: #{tpu_custom_call.1} parent=1 // pred_check
      _
    $region3: #{tpu_custom_call.1} parent=1 // pred_check_branch
      %15 = sbr.rel (0) target = $region5
    $region4: #{tpu_custom_call.1} parent=1 // pred_region
      %s17 = ssub.s32 128, 128
      %18 = vsyncadd [#allocation3], %s17
      %s20 = sshll.u32 [#allocation2], 4
      %s21 = int_to_ptr.vmem [resolvable:$true] %s20
      %23 = dma.hbm_to_vmem [thread:$0]  %s0, 128, %s21, [#allocation3]
    $region5: #{tpu_custom_call.1} parent=1 // pred_fallthru
      _
    // Predicated region
    $region6: #{tpu_custom_call.1} parent=1 // pred_check
      _
    $region7: #{tpu_custom_call.1} parent=1 // pred_check_branch
      %25 = sbr.rel (0) target = $region9
    $region8: #{tpu_custom_call.1} parent=1 // pred_region
      %s27 = ssub.s32 192, 192
      %28 = vsyncadd [#allocation6], %s27
      %s29 = sshll.u32 [#allocation5], 4
      %s30 = int_to_ptr.vmem [resolvable:$true] %s29
      %35 = dma.hbm_to_vmem [thread:$0]  %s1, 192, %s30, [#allocation6], 64, 64, 4
    $region9: #{tpu_custom_call.1} parent=1 // pred_fallthru
      _
    // Predicated region
    $region10: #{tpu_custom_call.1} parent=1 // pred_check
      _
    $region11: #{tpu_custom_call.1} parent=1 // pred_check_branch
      %37 = sbr.rel (0) target = $region13
    $region12: #{tpu_custom_call.1} parent=1 // pred_region
      %s39 = ssub.s32 1024, 1024
      %40 = vsyncadd [#allocation6], %s39
      %s41 = sshll.u32 [#allocation7], 4
      %s42 = int_to_ptr.vmem [resolvable:$true] %s41
      %47 = dma.hbm_to_vmem [thread:$0]  %s2, 1024, %s42, [#allocation6], 64, 64, 4
    $region13: #{tpu_custom_call.1} parent=1 // pred_fallthru
      _
    // Predicated region
    $region14: #{tpu_custom_call.1} parent=1 // pred_check
      _
    $region15: #{tpu_custom_call.1} parent=1 // pred_check_branch
      %49 = sbr.rel (0) target = $region17
    $region16: #{tpu_custom_call.1} parent=1 // pred_region
      %s51 = ssub.s32 1024, 1024
      %52 = vsyncadd [#allocation9], %s51
      %s53 = sshll.u32 [#allocation8], 4
      %s54 = int_to_ptr.vmem [resolvable:$true] %s53
      %59 = dma.hbm_to_vmem [thread:$0]  %s3, 1024, %s54, [#allocation9], 64, 64, 4
    $region17: #{tpu_custom_call.1} parent=1 // pred_fallthru
      _
    // Predicated region
    $region18: #{tpu_custom_call.1} parent=1 // pred_check
      _
    $region19: #{tpu_custom_call.1} parent=1 // pred_check_branch
      %61 = sbr.rel (0) target = $region21
    $region20: #{tpu_custom_call.1} parent=1 // pred_region
      _
    $region21: #{tpu_custom_call.1} parent=1 // pred_fallthru
      _
    // Predicated region
    $region22: #{tpu_custom_call.1} parent=1 // pred_check
      _
    $region23: #{tpu_custom_call.1} parent=1 // pred_check_branch
      %63 = sbr.rel (0) target = $region25
    $region24: #{tpu_custom_call.1} parent=1 // pred_region
      %64 = dma.done [#allocation3], 128
    $region25: #{tpu_custom_call.1} parent=1 // pred_fallthru
      _
    // Predicated region
    $region26: #{tpu_custom_call.1} parent=1 // pred_check
      _
    $region27: #{tpu_custom_call.1} parent=1 // pred_check_branch
      %66 = sbr.rel (0) target = $region29
    $region28: #{tpu_custom_call.1} parent=1 // pred_region
      %67 = dma.done [#allocation6], 192
    $region29: #{tpu_custom_call.1} parent=1 // pred_fallthru
      _
    // Predicated region
    $region30: #{tpu_custom_call.1} parent=1 // pred_check
      _
    $region31: #{tpu_custom_call.1} parent=1 // pred_check_branch
      %69 = sbr.rel (0) target = $region33
    $region32: #{tpu_custom_call.1} parent=1 // pred_region
      %70 = dma.done [#allocation6], 1024
    $region33: #{tpu_custom_call.1} parent=1 // pred_fallthru
      _
    // Predicated region
    $region34: #{tpu_custom_call.1} parent=1 // pred_check
      _
    $region35: #{tpu_custom_call.1} parent=1 // pred_check_branch
      %72 = sbr.rel (0) target = $region37
    $region36: #{tpu_custom_call.1} parent=1 // pred_region
      %73 = dma.done [#allocation9], 1024
    $region37: #{tpu_custom_call.1} parent=1 // pred_fallthru
      _
    %v75 = vld [vmem:[#allocation2] sm:$0xff]
    %v76 = vpack.c.bf16 %v75, %v75
    %v77 = vld [vmem:[#allocation5] sm:$0xf]
    %v78 = vld [vmem:[#allocation5 + $0x4] sm:$0xf]
    %v79 = vld [vmem:[#allocation5 + $0x8] sm:$0x1]
    %v80 = vld [vmem:[%s4] sm:$0x1]
    %v81 = vlaneseq
    %v82 = vshrl.u32 %v81, 7
    %v83 = vsub.s32 0, %v82
    %v84 = vrot.slane %v80, %v83
    %v88 = vunpack.c.l.b16 %v77
    %v89 = vunpack.c.l.b16 %v78
    %v90 = vunpack.c.l.b16 %v79
    %v91 = vpack.c.b16 %v89, %v88
    %v92 = vpack.c.b16 %v90, %v90
    %vm94 = vcmask 138240
    %v96 = vsel %vm94, %v76, 0
    %vm98 = vcmask 1040384
    %v99 = vsel 0, 4294967295, 65535
    %v100 = vsel %vm98, %v99, 0
    %v102 = vand.u32 %v92, %v100
    %104 = vmatprep.subr.bf16.mxu0 0
    %105 = vmatpush1.bf16.msra.mxu0 0
    %106 = vmatprep.subr.bf16.mxu0 0
    %107 = vmatpush1.bf16.msra.mxu0 0
    %108 = vmatprep.subr.bf16.mxu0 0
    %109 = vmatpush1.bf16.msra.mxu0 0
    %110 = vmatprep.subr.bf16.mxu0 0
    %111 = vmatpush1.bf16.msra.mxu0 0
    %112 = vmatprep.subr.bf16.mxu0 0
    %113 = vmatpush1.bf16.msra.mxu0 0
    %114 = vmatprep.subr.bf16.mxu0 0
    %115 = vmatpush1.bf16.msra.mxu0 0
    %116 = vmatprep.subr.bf16.mxu0 0
    %117 = vmatpush1.bf16.msra.mxu0 %v102
    %118 = vmatprep.subr.bf16.mxu0 0
    %119 = vmatpush1.bf16.msra.mxu0 %v91
    %120 = vmatprep.subr.bf16.mxu0 0
    %121 = vmatpush2.bf16.msra.mxu0 0
    %122 = vmatprep.subr.bf16.mxu0 0
    %123 = vmatpush2.bf16.msra.mxu0 0
    %124 = vmatprep.subr.bf16.mxu0 0
    %125 = vmatpush2.bf16.msra.mxu0 0
    %126 = vmatprep.subr.bf16.mxu0 0
    %127 = vmatpush2.bf16.msra.mxu0 0
    %128 = vmatprep.subr.bf16.mxu0 0
    %129 = vmatpush2.bf16.msra.mxu0 0
    %130 = vmatprep.subr.bf16.mxu0 0
    %131 = vmatpush2.bf16.msra.mxu0 0
    %132 = vmatprep.subr.bf16.mxu0 0
    %133 = vmatpush2.bf16.msra.mxu0 0
    %134 = vmatprep.subr.bf16.mxu0 0
    %135 = vmatpush2.bf16.msra.mxu0 0
    %136 = vmatprep.mubr.bf16.mxu0 0
    %137 = vmatmul.mubr.bf16.gmra.mxu0 %v96
    %v138 = vpop.f32.mrf.mxu0
    %v139 = vadd.f32 %v84, %v138
    %v140 = vpop.f32.mrf.mxu0
    %v141 = vpop.f32.mrf.mxu0
    %v142 = vpop.f32.mrf.mxu0
    %143 = vdwg.mxu0
    %v144 = vmax.f32 %v139, 0.0
    %v145 = vpack.c.bf16 %v144, %v144
    %v146 = vld [vmem:[#allocation7] sm:$0xf]
    %v147 = vld [vmem:[#allocation7 + $0x4] sm:$0xf]
    %v148 = vld [vmem:[#allocation7 + $0x8] sm:$0xf]
    %v149 = vld [vmem:[#allocation7 + $0xc] sm:$0xf]
    %v150 = vld [vmem:[#allocation7 + $0x10] sm:$0xf]
    %v151 = vld [vmem:[#allocation7 + $0x14] sm:$0xf]
    %v152 = vld [vmem:[#allocation7 + $0x18] sm:$0xf]
    %v153 = vld [vmem:[#allocation7 + $0x1c] sm:$0xf]
    %v154 = vld [vmem:[#allocation7 + $0x20] sm:$0xf]
    %v155 = vld [vmem:[#allocation7 + $0x24] sm:$0xf]
    %v156 = vld [vmem:[#allocation7 + $0x28] sm:$0xf]
    %v157 = vld [vmem:[#allocation7 + $0x2c] sm:$0xf]
    %v158 = vld [vmem:[#allocation7 + $0x30] sm:$0xf]
    %v159 = vld [vmem:[#allocation7 + $0x34] sm:$0xf]
    %v160 = vld [vmem:[#allocation7 + $0x38] sm:$0xf]
    %v161 = vld [vmem:[#allocation7 + $0x3c] sm:$0xf]
    %v162 = vld [vmem:[%s4 + $0x1] sm:$0x1]
    %v163 = vlaneseq
    %v164 = vshrl.u32 %v163, 7
    %v165 = vsub.s32 0, %v164
    %v166 = vrot.slane %v162, %v165
    %v183 = vunpack.c.l.b16 %v146
    %v184 = vunpack.c.l.b16 %v147
    %v185 = vunpack.c.l.b16 %v148
    %v186 = vunpack.c.l.b16 %v149
    %v187 = vunpack.c.l.b16 %v150
    %v188 = vunpack.c.l.b16 %v151
    %v189 = vunpack.c.l.b16 %v152
    %v190 = vunpack.c.l.b16 %v153
    %v191 = vunpack.c.l.b16 %v154
    %v192 = vunpack.c.l.b16 %v155
    %v193 = vunpack.c.l.b16 %v156
    %v194 = vunpack.c.l.b16 %v157
    %v195 = vunpack.c.l.b16 %v158
    %v196 = vunpack.c.l.b16 %v159
    %v197 = vunpack.c.l.b16 %v160
    %v198 = vunpack.c.l.b16 %v161
    %v199 = vpack.c.b16 %v184, %v183
    %v200 = vpack.c.b16 %v186, %v185
    %v201 = vpack.c.b16 %v188, %v187
    %v202 = vpack.c.b16 %v190, %v189
    %v203 = vpack.c.b16 %v192, %v191
    %v204 = vpack.c.b16 %v194, %v193
    %v205 = vpack.c.b16 %v196, %v195
    %v206 = vpack.c.b16 %v198, %v197
    %215 = vmatprep.subr.bf16.mxu0 0
    %216 = vmatpush1.bf16.msra.mxu0 %v206
    %217 = vmatprep.subr.bf16.mxu0 0
    %218 = vmatpush1.bf16.msra.mxu0 %v205
    %219 = vmatprep.subr.bf16.mxu0 0
    %220 = vmatpush1.bf16.msra.mxu0 %v204
    %221 = vmatprep.subr.bf16.mxu0 0
    %222 = vmatpush1.bf16.msra.mxu0 %v203
    %223 = vmatprep.subr.bf16.mxu0 0
    %224 = vmatpush1.bf16.msra.mxu0 %v202
    %225 = vmatprep.subr.bf16.mxu0 0
    %226 = vmatpush1.bf16.msra.mxu0 %v201
    %227 = vmatprep.subr.bf16.mxu0 0
    %228 = vmatpush1.bf16.msra.mxu0 %v200
    %229 = vmatprep.subr.bf16.mxu0 0
    %230 = vmatpush1.bf16.msra.mxu0 %v199
    %231 = vmatprep.subr.bf16.mxu0 0
    %232 = vmatpush2.bf16.msra.mxu0 0
    %233 = vmatprep.subr.bf16.mxu0 0
    %234 = vmatpush2.bf16.msra.mxu0 0
    %235 = vmatprep.subr.bf16.mxu0 0
    %236 = vmatpush2.bf16.msra.mxu0 0
    %237 = vmatprep.subr.bf16.mxu0 0
    %238 = vmatpush2.bf16.msra.mxu0 0
    %239 = vmatprep.subr.bf16.mxu0 0
    %240 = vmatpush2.bf16.msra.mxu0 0
    %241 = vmatprep.subr.bf16.mxu0 0
    %242 = vmatpush2.bf16.msra.mxu0 0
    %243 = vmatprep.subr.bf16.mxu0 0
    %244 = vmatpush2.bf16.msra.mxu0 0
    %245 = vmatprep.subr.bf16.mxu0 0
    %246 = vmatpush2.bf16.msra.mxu0 0
    %247 = vmatprep.mubr.bf16.mxu0 0
    %248 = vmatmul.mubr.bf16.gmra.mxu0 %v145
    %v249 = vpop.f32.mrf.mxu0
    %v250 = vadd.f32 %v166, %v249
    %v251 = vpop.f32.mrf.mxu0
    %v252 = vpop.f32.mrf.mxu0
    %v253 = vpop.f32.mrf.mxu0
    %254 = vdwg.mxu0
    %v255 = vmax.f32 %v250, 0.0
    %v256 = vpack.c.bf16 %v255, %v255
    %v257 = vld [vmem:[#allocation8] sm:$0xf]
    %v258 = vld [vmem:[#allocation8 + $0x4] sm:$0xf]
    %v259 = vld [vmem:[#allocation8 + $0x8] sm:$0xf]
    %v260 = vld [vmem:[#allocation8 + $0xc] sm:$0xf]
    %v261 = vld [vmem:[#allocation8 + $0x10] sm:$0xf]
    %v262 = vld [vmem:[#allocation8 + $0x14] sm:$0xf]
    %v263 = vld [vmem:[#allocation8 + $0x18] sm:$0xf]
    %v264 = vld [vmem:[#allocation8 + $0x1c] sm:$0xf]
    %v265 = vld [vmem:[#allocation8 + $0x20] sm:$0xf]
    %v266 = vld [vmem:[#allocation8 + $0x24] sm:$0xf]
    %v267 = vld [vmem:[#allocation8 + $0x28] sm:$0xf]
    %v268 = vld [vmem:[#allocation8 + $0x2c] sm:$0xf]
    %v269 = vld [vmem:[#allocation8 + $0x30] sm:$0xf]
    %v270 = vld [vmem:[#allocation8 + $0x34] sm:$0xf]
    %v271 = vld [vmem:[#allocation8 + $0x38] sm:$0xf]
    %v272 = vld [vmem:[#allocation8 + $0x3c] sm:$0xf]
    %v273 = vld [vmem:[%s4 + $0x2] sm:$0x1]
    %v274 = vlaneseq
    %v275 = vshrl.u32 %v274, 7
    %v276 = vsub.s32 0, %v275
    %v277 = vrot.slane %v273, %v276
    %v294 = vunpack.c.l.b16 %v257
    %v295 = vunpack.c.l.b16 %v258
    %v296 = vunpack.c.l.b16 %v259
    %v297 = vunpack.c.l.b16 %v260
    %v298 = vunpack.c.l.b16 %v261
    %v299 = vunpack.c.l.b16 %v262
    %v300 = vunpack.c.l.b16 %v263
    %v301 = vunpack.c.l.b16 %v264
    %v302 = vunpack.c.l.b16 %v265
    %v303 = vunpack.c.l.b16 %v266
    %v304 = vunpack.c.l.b16 %v267
    %v305 = vunpack.c.l.b16 %v268
    %v306 = vunpack.c.l.b16 %v269
    %v307 = vunpack.c.l.b16 %v270
    %v308 = vunpack.c.l.b16 %v271
    %v309 = vunpack.c.l.b16 %v272
    %v310 = vpack.c.b16 %v295, %v294
    %v311 = vpack.c.b16 %v297, %v296
    %v312 = vpack.c.b16 %v299, %v298
    %v313 = vpack.c.b16 %v301, %v300
    %v314 = vpack.c.b16 %v303, %v302
    %v315 = vpack.c.b16 %v305, %v304
    %v316 = vpack.c.b16 %v307, %v306
    %v317 = vpack.c.b16 %v309, %v308
    %326 = vmatprep.subr.bf16.mxu0 0
    %327 = vmatpush1.bf16.msra.mxu0 %v317
    %328 = vmatprep.subr.bf16.mxu0 0
    %329 = vmatpush1.bf16.msra.mxu0 %v316
    %330 = vmatprep.subr.bf16.mxu0 0
    %331 = vmatpush1.bf16.msra.mxu0 %v315
    %332 = vmatprep.subr.bf16.mxu0 0
    %333 = vmatpush1.bf16.msra.mxu0 %v314
    %334 = vmatprep.subr.bf16.mxu0 0
    %335 = vmatpush1.bf16.msra.mxu0 %v313
    %336 = vmatprep.subr.bf16.mxu0 0
    %337 = vmatpush1.bf16.msra.mxu0 %v312
    %338 = vmatprep.subr.bf16.mxu0 0
    %339 = vmatpush1.bf16.msra.mxu0 %v311
    %340 = vmatprep.subr.bf16.mxu0 0
    %341 = vmatpush1.bf16.msra.mxu0 %v310
    %342 = vmatprep.subr.bf16.mxu0 0
    %343 = vmatpush2.bf16.msra.mxu0 0
    %344 = vmatprep.subr.bf16.mxu0 0
    %345 = vmatpush2.bf16.msra.mxu0 0
    %346 = vmatprep.subr.bf16.mxu0 0
    %347 = vmatpush2.bf16.msra.mxu0 0
    %348 = vmatprep.subr.bf16.mxu0 0
    %349 = vmatpush2.bf16.msra.mxu0 0
    %350 = vmatprep.subr.bf16.mxu0 0
    %351 = vmatpush2.bf16.msra.mxu0 0
    %352 = vmatprep.subr.bf16.mxu0 0
    %353 = vmatpush2.bf16.msra.mxu0 0
    %354 = vmatprep.subr.bf16.mxu0 0
    %355 = vmatpush2.bf16.msra.mxu0 0
    %356 = vmatprep.subr.bf16.mxu0 0
    %357 = vmatpush2.bf16.msra.mxu0 0
    %358 = vmatprep.mubr.bf16.mxu0 0
    %359 = vmatmul.mubr.bf16.gmra.mxu0 %v256
    %v360 = vpop.f32.mrf.mxu0
    %v361 = vadd.f32 %v277, %v360
    %v362 = vpop.f32.mrf.mxu0
    %v363 = vpop.f32.mrf.mxu0
    %v364 = vpop.f32.mrf.mxu0
    %365 = vdwg.mxu0
    %v366 = vtanh.pop %v361
    %367 = vst [vmem:[#allocation10] sm:$0xff] %v366
    // Predicated region
    $region38: #{tpu_custom_call.1} parent=1 // pred_check
      _
    $region39: #{tpu_custom_call.1} parent=1 // pred_check_branch
      %369 = sbr.rel (0) target = $region41
    $region40: #{tpu_custom_call.1} parent=1 // pred_region
      %s371 = ssub.s32 128, 128
      %372 = vsyncadd [#allocation4], %s371
      %s374 = sshll.u32 [#allocation10], 4
      %s375 = int_to_ptr.vmem [resolvable:$true] %s374
      %377 = dma.vmem_to_hbm [thread:$0]  %s375, 128, %s5, [#allocation4]
    $region41: #{tpu_custom_call.1} parent=1 // pred_fallthru
      _
    // Predicated region
    $region42: #{tpu_custom_call.1} parent=1 // pred_check
      _
    $region43: #{tpu_custom_call.1} parent=1 // pred_check_branch
      %379 = sbr.rel (0) target = $region45
    $region44: #{tpu_custom_call.1} parent=1 // pred_region
      %380 = dma.done [#allocation4], 128
    $region45: #{tpu_custom_call.1} parent=1 // pred_fallthru
      _
    %381 = vsyncpa [#allocation3], 1
    %382 = vsyncpa [#allocation6], 1
    %383 = vsyncpa [#allocation9], 1
    %384 = vsyncpa [#allocation4], 1

</llo_original>
